<compile_context>
chip_gen: v7x
topology: tpu7x:2x2x1
jax: 0.10.0
libtpu: 0.0.40
codegen_flags: <defaults>
</compile_context>

<pallas_src>
import functools

import jax
import jax.numpy as jnp
from jax.experimental import pallas as pl
from jax.experimental.pallas import tpu as pltpu

BN_EPS = 1e-5
IN_DIM = 28 * 28   # 784
H1 = 128
H2 = 64            # logical bottleneck width
H2P = 128          # padded bottleneck width (lane-dense)


# ----------------------------------------------------------------------------- kernel
def _autoencoder_kernel(x_ref, w1, b1, w2, b2, w3, b3, w4, b4, o_ref):
    """One batch tile: (TB, 784) -> (TB, 784). BN already folded into W/b."""
    x = x_ref[...]                                                       # (TB, 784) f32

    h = jnp.dot(x, w1[...], preferred_element_type=jnp.float32) + b1[...]   # (TB, 128)
    h = jnp.maximum(h, 0.0)                                                  # ReLU
    # Dropout(0.2): identity in eval mode.

    h = jnp.dot(h, w2[...], preferred_element_type=jnp.float32) + b2[...]   # (TB, 128) padded
    h = jnp.maximum(h, 0.0)

    h = jnp.dot(h, w3[...], preferred_element_type=jnp.float32) + b3[...]   # (TB, 128)
    h = jnp.maximum(h, 0.0)

    h = jnp.dot(h, w4[...], preferred_element_type=jnp.float32) + b4[...]   # (TB, 784)

    # Sigmoid: exp on EUP, approximate reciprocal on EUP (no VPU divide).
    o_ref[...] = pl.reciprocal(1.0 + jnp.exp(-h), approx=True).astype(o_ref.dtype)


# ----------------------------------------------------------------------------- params
def _init_params(key):
    """PyTorch-style init: Linear uniform(+/- 1/sqrt(fan_in)); BN gamma=1, beta=0,
    running_mean=0, running_var=1."""
    dims = [(IN_DIM, H1), (H1, H2), (H2, H1), (H1, IN_DIM)]
    params = []
    keys = jax.random.split(key, 2 * len(dims))
    for i, (fan_in, fan_out) in enumerate(dims):
        bound = 1.0 / jnp.sqrt(float(fan_in))
        w = jax.random.uniform(keys[2 * i], (fan_in, fan_out),
                               minval=-bound, maxval=bound, dtype=jnp.float32)
        b = jax.random.uniform(keys[2 * i + 1], (1, fan_out),
                               minval=-bound, maxval=bound, dtype=jnp.float32)
        params.append((w, b))

    def bn(n):
        return (jnp.ones((1, n), jnp.float32),    # gamma
                jnp.zeros((1, n), jnp.float32),   # beta
                jnp.zeros((1, n), jnp.float32),   # running_mean
                jnp.ones((1, n), jnp.float32))    # running_var

    bns = [bn(H1), bn(H2), bn(H1)]
    return params, bns


def _fold_bn(w, b, gamma, beta, mean, var):
    """Fold eval-mode BatchNorm1d into the preceding Linear: W' = W*s, b' = (b-m)*s + beta."""
    scale = gamma * jax.lax.rsqrt(var + BN_EPS)   # (1, N)
    return w * scale, (b - mean) * scale + beta


# ----------------------------------------------------------------------------- wrapper
@functools.partial(jax.jit, static_argnames=())
def autoencoder_forward(x_nchw, params, bns):
    B = x_nchw.shape[0]
    x_flat = x_nchw.reshape(B, IN_DIM).astype(jnp.float32)          # x.view(B, -1)

    (w1, b1), (w2, b2), (w3, b3), (w4, b4) = params
    (g1, be1, m1, v1), (g2, be2, m2, v2), (g3, be3, m3, v3) = bns

    # --- fold BatchNorm into the Linear layers (eval mode, numerically identical) ---
    w1f, b1f = _fold_bn(w1, b1, g1, be1, m1, v1)                     # (784,128), (1,128)
    w2f, b2f = _fold_bn(w2, b2, g2, be2, m2, v2)                     # (128, 64), (1, 64)
    w3f, b3f = _fold_bn(w3, b3, g3, be3, m3, v3)                     # ( 64,128), (1,128)
    # w4/b4 have no BN; sigmoid applied in-kernel.

    # --- zero-pad the 64-wide bottleneck to 128 (lane-dense; bit-identical result) ---
    w2p = jnp.pad(w2f, ((0, 0), (0, H2P - H2)))                      # (128,128)
    b2p = jnp.pad(b2f, ((0, 0), (0, H2P - H2)))                      # (1,128)
    w3p = jnp.pad(w3f, ((0, H2P - H2), (0, 0)))                      # (128,128)

    # --- batch tiling: grid over batch, weights resident across steps ---
    TB = 128 if B >= 128 else ((B + 7) // 8) * 8
    n_tiles = -(-B // TB)
    B_pad = n_tiles * TB
    if B_pad != B:
        x_flat = jnp.pad(x_flat, ((0, B_pad - B), (0, 0)))

    act_spec = pl.BlockSpec((TB, IN_DIM), lambda i: (i, 0))
    const = lambda i: (0, 0)                                         # weights stay resident
    in_specs = [
        act_spec,                                                    # x
        pl.BlockSpec((IN_DIM, H1), const), pl.BlockSpec((1, H1), const),   # w1, b1
        pl.BlockSpec((H1, H2P), const),    pl.BlockSpec((1, H2P), const),  # w2, b2 (padded)
        pl.BlockSpec((H2P, H1), const),    pl.BlockSpec((1, H1), const),   # w3, b3 (padded)
        pl.BlockSpec((H1, IN_DIM), const), pl.BlockSpec((1, IN_DIM), const),  # w4, b4
    ]

    flops = 2 * B_pad * (IN_DIM * H1 + H1 * H2P + H2P * H1 + H1 * IN_DIM)
    weight_bytes = 4 * (IN_DIM * H1 + H1 * H2P + H2P * H1 + H1 * IN_DIM + 2 * H1 + H2P + IN_DIM)
    cost = pl.CostEstimate(
        flops=flops,
        transcendentals=B_pad * IN_DIM,
        bytes_accessed=weight_bytes + 2 * B_pad * IN_DIM * 4,
    )

    out_flat = pl.pallas_call(
        _autoencoder_kernel,
        out_shape=jax.ShapeDtypeStruct((B_pad, IN_DIM), jnp.float32),
        grid=(n_tiles,),
        in_specs=in_specs,
        out_specs=act_spec,
        compiler_params=pltpu.CompilerParams(
            dimension_semantics=("parallel",),        # shard batch tiles across TCs (v7x)
            vmem_limit_bytes=16 << 20,                # working set is a few MiB
        ),
        cost_estimate=cost,
    )(x_flat, w1f, b1f, w2p, b2p, w3p, b3f, w4, b4)

    return out_flat[:B].reshape(B, 1, 28, 28)                        # decoded.view(B,1,28,28)


# ----------------------------------------------------------------------------- reference
def _reference_forward(x_nchw, params, bns):
    """Pure-JAX reference (unfolded BN) for correctness checking."""
    B = x_nchw.shape[0]
    h = x_nchw.reshape(B, IN_DIM).astype(jnp.float32)
    (w1, b1), (w2, b2), (w3, b3), (w4, b4) = params
    (g1, be1, m1, v1), (g2, be2, m2, v2), (g3, be3, m3, v3) = bns

    def bn(h, g, be, m, v):
        return (h - m) / jnp.sqrt(v + BN_EPS) * g + be

    h = jnp.maximum(bn(h @ w1 + b1, g1, be1, m1, v1), 0.0)
    h = jnp.maximum(bn(h @ w2 + b2, g2, be2, m2, v2), 0.0)
    h = jnp.maximum(bn(h @ w3 + b3, g3, be3, m3, v3), 0.0)
    h = jax.nn.sigmoid(h @ w4 + b4)
    return h.reshape(B, 1, 28, 28)


if __name__ == "__main__":
    key = jax.random.PRNGKey(0)
    k_param, k_x1, k_x2 = jax.random.split(key, 3)

    params, bns = _init_params(k_param)

    # Small batch, MNIST-shaped input (B, 1, 28, 28) as implied by the forward pass.
    x_small = jax.random.uniform(k_x1, (8, 1, 28, 28), dtype=jnp.float32)
    out_small = autoencoder_forward(x_small, params, bns)
    jax.block_until_ready(out_small)
    ref_small = _reference_forward(x_small, params, bns)
    assert out_small.shape == (8, 1, 28, 28), out_small.shape
    assert jnp.allclose(out_small, ref_small, atol=2e-3, rtol=2e-3), "mismatch vs reference (B=8)"

    # Larger, non-tile-multiple batch exercises the grid + batch-padding path.
    x_big = jax.random.uniform(k_x2, (130, 1, 28, 28), dtype=jnp.float32)
    out_big = autoencoder_forward(x_big, params, bns)
    jax.block_until_ready(out_big)
    ref_big = _reference_forward(x_big, params, bns)
    assert out_big.shape == (130, 1, 28, 28), out_big.shape
    assert jnp.allclose(out_big, ref_big, atol=2e-3, rtol=2e-3), "mismatch vs reference (B=130)"

    # TODO(synk): training-mode BatchNorm (batch statistics) and stochastic Dropout
    # are not implemented; eval-mode semantics are used.
    print("KERNEL_OK")
</pallas_src>

<mosaic_0001>
module attributes {stable_mosaic.version = 11 : i64} {
  func.func @_autoencoder_kernel(%arg0: i32, %arg1: memref<8x784xf32, #tpu.memory_space<vmem>>, %arg2: memref<784x128xf32, #tpu.memory_space<vmem>>, %arg3: memref<1x128xf32, #tpu.memory_space<vmem>>, %arg4: memref<128x128xf32, #tpu.memory_space<vmem>>, %arg5: memref<1x128xf32, #tpu.memory_space<vmem>>, %arg6: memref<128x128xf32, #tpu.memory_space<vmem>>, %arg7: memref<1x128xf32, #tpu.memory_space<vmem>>, %arg8: memref<128x784xf32, #tpu.memory_space<vmem>>, %arg9: memref<1x784xf32, #tpu.memory_space<vmem>>, %arg10: memref<8x784xf32, #tpu.memory_space<vmem>>) attributes {dimension_semantics = [#tpu.dimension_semantics<parallel>], iteration_bounds = array<i64: 1>, scalar_prefetch = 0 : i64, scratch_operands = 0 : i64, tpu.core_type = #tpu.core_type<tc>, window_params = [{transform_indices = @transform_0, window_bounds = array<i64: 8, 784>}, {pipeline_mode = #tpu.pipeline_mode<synchronous>, transform_indices = @transform_1, window_bounds = array<i64: 784, 128>}, {pipeline_mode = #tpu.pipeline_mode<synchronous>, transform_indices = @transform_2, window_bounds = array<i64: 1, 128>}, {pipeline_mode = #tpu.pipeline_mode<synchronous>, transform_indices = @transform_3, window_bounds = array<i64: 128, 128>}, {pipeline_mode = #tpu.pipeline_mode<synchronous>, transform_indices = @transform_4, window_bounds = array<i64: 1, 128>}, {pipeline_mode = #tpu.pipeline_mode<synchronous>, transform_indices = @transform_5, window_bounds = array<i64: 128, 128>}, {pipeline_mode = #tpu.pipeline_mode<synchronous>, transform_indices = @transform_6, window_bounds = array<i64: 1, 128>}, {pipeline_mode = #tpu.pipeline_mode<synchronous>, transform_indices = @transform_7, window_bounds = array<i64: 128, 784>}, {pipeline_mode = #tpu.pipeline_mode<synchronous>, transform_indices = @transform_8, window_bounds = array<i64: 1, 784>}, {transform_indices = @transform_9, window_bounds = array<i64: 8, 784>}]} {
    %c0 = arith.constant 0 : index
    %c0_0 = arith.constant 0 : index
    %0 = vector.load %arg1[%c0, %c0_0] : memref<8x784xf32, #tpu.memory_space<vmem>>, vector<8x784xf32>
    %c0_1 = arith.constant 0 : index
    %c0_2 = arith.constant 0 : index
    %1 = vector.load %arg2[%c0_1, %c0_2] : memref<784x128xf32, #tpu.memory_space<vmem>>, vector<784x128xf32>
    %cst = arith.constant dense<0.000000e+00> : vector<8x128xf32>
    %2 = tpu.matmul %0, %1, %cst {dimension_numbers = #tpu.dot_dimension_numbers<[1], [0], [0], [1], [0, 0, 1, 1], [], []>} : vector<8x784xf32>, vector<784x128xf32>, vector<8x128xf32> -> vector<8x128xf32>
    %c0_3 = arith.constant 0 : index
    %c0_4 = arith.constant 0 : index
    %3 = vector.load %arg3[%c0_3, %c0_4] : memref<1x128xf32, #tpu.memory_space<vmem>>, vector<1x128xf32>
    %4 = vector.broadcast %3 : vector<1x128xf32> to vector<8x128xf32>
    %5 = arith.addf %2, %4 : vector<8x128xf32>
    %cst_5 = arith.constant 0.000000e+00 : f32
    %6 = vector.broadcast %cst_5 : f32 to vector<8x128xf32>
    %7 = arith.maximumf %5, %6 : vector<8x128xf32>
    %c0_6 = arith.constant 0 : index
    %c0_7 = arith.constant 0 : index
    %8 = vector.load %arg4[%c0_6, %c0_7] : memref<128x128xf32, #tpu.memory_space<vmem>>, vector<128x128xf32>
    %cst_8 = arith.constant dense<0.000000e+00> : vector<8x128xf32>
    %9 = tpu.matmul %7, %8, %cst_8 {dimension_numbers = #tpu.dot_dimension_numbers<[1], [0], [0], [1], [0, 0, 1, 1], [], []>} : vector<8x128xf32>, vector<128x128xf32>, vector<8x128xf32> -> vector<8x128xf32>
    %c0_9 = arith.constant 0 : index
    %c0_10 = arith.constant 0 : index
    %10 = vector.load %arg5[%c0_9, %c0_10] : memref<1x128xf32, #tpu.memory_space<vmem>>, vector<1x128xf32>
    %11 = vector.broadcast %10 : vector<1x128xf32> to vector<8x128xf32>
    %12 = arith.addf %9, %11 : vector<8x128xf32>
    %cst_11 = arith.constant 0.000000e+00 : f32
    %13 = vector.broadcast %cst_11 : f32 to vector<8x128xf32>
    %14 = arith.maximumf %12, %13 : vector<8x128xf32>
    %c0_12 = arith.constant 0 : index
    %c0_13 = arith.constant 0 : index
    %15 = vector.load %arg6[%c0_12, %c0_13] : memref<128x128xf32, #tpu.memory_space<vmem>>, vector<128x128xf32>
    %cst_14 = arith.constant dense<0.000000e+00> : vector<8x128xf32>
    %16 = tpu.matmul %14, %15, %cst_14 {dimension_numbers = #tpu.dot_dimension_numbers<[1], [0], [0], [1], [0, 0, 1, 1], [], []>} : vector<8x128xf32>, vector<128x128xf32>, vector<8x128xf32> -> vector<8x128xf32>
    %c0_15 = arith.constant 0 : index
    %c0_16 = arith.constant 0 : index
    %17 = vector.load %arg7[%c0_15, %c0_16] : memref<1x128xf32, #tpu.memory_space<vmem>>, vector<1x128xf32>
    %18 = vector.broadcast %17 : vector<1x128xf32> to vector<8x128xf32>
    %19 = arith.addf %16, %18 : vector<8x128xf32>
    %cst_17 = arith.constant 0.000000e+00 : f32
    %20 = vector.broadcast %cst_17 : f32 to vector<8x128xf32>
    %21 = arith.maximumf %19, %20 : vector<8x128xf32>
    %c0_18 = arith.constant 0 : index
    %c0_19 = arith.constant 0 : index
    %22 = vector.load %arg8[%c0_18, %c0_19] : memref<128x784xf32, #tpu.memory_space<vmem>>, vector<128x784xf32>
    %cst_20 = arith.constant dense<0.000000e+00> : vector<8x784xf32>
    %23 = tpu.matmul %21, %22, %cst_20 {dimension_numbers = #tpu.dot_dimension_numbers<[1], [0], [0], [1], [0, 0, 1, 1], [], []>} : vector<8x128xf32>, vector<128x784xf32>, vector<8x784xf32> -> vector<8x784xf32>
    %c0_21 = arith.constant 0 : index
    %c0_22 = arith.constant 0 : index
    %24 = vector.load %arg9[%c0_21, %c0_22] : memref<1x784xf32, #tpu.memory_space<vmem>>, vector<1x784xf32>
    %25 = vector.broadcast %24 : vector<1x784xf32> to vector<8x784xf32>
    %26 = arith.addf %23, %25 : vector<8x784xf32>
    %cst_23 = arith.constant 0.000000e+00 : f32
    %27 = vector.broadcast %cst_23 : f32 to vector<8x784xf32>
    %28 = arith.subf %27, %26 : vector<8x784xf32>
    %29 = math.exp %28 : vector<8x784xf32>
    %cst_24 = arith.constant 1.000000e+00 : f32
    %30 = vector.broadcast %cst_24 : f32 to vector<8x784xf32>
    %31 = arith.addf %30, %29 : vector<8x784xf32>
    %32 = tpu.reciprocal %31 {approx = true} : vector<8x784xf32> -> vector<8x784xf32>
    %c0_25 = arith.constant 0 : index
    %c0_26 = arith.constant 0 : index
    %33 = vector.load %arg10[%c0_25, %c0_26] : memref<8x784xf32, #tpu.memory_space<vmem>>, vector<8x784xf32>
    tpu.vector_store %arg10[%c0_25, %c0_26], %32 {strides = array<i32>} : memref<8x784xf32, #tpu.memory_space<vmem>>, vector<8x784xf32>,
    return
  }
  func.func @transform_0(%arg0: i32) -> (i32, i32) {
    %c0_i32 = arith.constant 0 : i32
    %c0_i32_0 = arith.constant 0 : i32
    return %arg0, %c0_i32 : i32, i32
  }
  func.func @transform_1(%arg0: i32) -> (i32, i32) {
    %c0_i32 = arith.constant 0 : i32
    %c0_i32_0 = arith.constant 0 : i32
    %c0_i32_1 = arith.constant 0 : i32
    return %c0_i32, %c0_i32_0 : i32, i32
  }
  func.func @transform_2(%arg0: i32) -> (i32, i32) {
    %c0_i32 = arith.constant 0 : i32
    %c0_i32_0 = arith.constant 0 : i32
    %c0_i32_1 = arith.constant 0 : i32
    return %c0_i32, %c0_i32_0 : i32, i32
  }
  func.func @transform_3(%arg0: i32) -> (i32, i32) {
    %c0_i32 = arith.constant 0 : i32
    %c0_i32_0 = arith.constant 0 : i32
    %c0_i32_1 = arith.constant 0 : i32
    return %c0_i32, %c0_i32_0 : i32, i32
  }
  func.func @transform_4(%arg0: i32) -> (i32, i32) {
    %c0_i32 = arith.constant 0 : i32
    %c0_i32_0 = arith.constant 0 : i32
    %c0_i32_1 = arith.constant 0 : i32
    return %c0_i32, %c0_i32_0 : i32, i32
  }
  func.func @transform_5(%arg0: i32) -> (i32, i32) {
    %c0_i32 = arith.constant 0 : i32
    %c0_i32_0 = arith.constant 0 : i32
    %c0_i32_1 = arith.constant 0 : i32
    return %c0_i32, %c0_i32_0 : i32, i32
  }
  func.func @transform_6(%arg0: i32) -> (i32, i32) {
    %c0_i32 = arith.constant 0 : i32
    %c0_i32_0 = arith.constant 0 : i32
    %c0_i32_1 = arith.constant 0 : i32
    return %c0_i32, %c0_i32_0 : i32, i32
  }
  func.func @transform_7(%arg0: i32) -> (i32, i32) {
    %c0_i32 = arith.constant 0 : i32
    %c0_i32_0 = arith.constant 0 : i32
    %c0_i32_1 = arith.constant 0 : i32
    return %c0_i32, %c0_i32_0 : i32, i32
  }
  func.func @transform_8(%arg0: i32) -> (i32, i32) {
    %c0_i32 = arith.constant 0 : i32
    %c0_i32_0 = arith.constant 0 : i32
    %c0_i32_1 = arith.constant 0 : i32
    return %c0_i32, %c0_i32_0 : i32, i32
  }
  func.func @transform_9(%arg0: i32) -> (i32, i32) {
    %c0_i32 = arith.constant 0 : i32
    %c0_i32_0 = arith.constant 0 : i32
    return %arg0, %c0_i32 : i32, i32
  }
}

</mosaic_0001>

<llo_original>
// kernel: autoencoder_forward.1
$region0: #{autoencoder_forward.1}
  #allocation0 [shape = 'u32[]', space=smem, size = 0x4, offset = 0x4, fixed_abs, tag = 'smem constant byte address 0x4 - core index']
  #allocation1 [shape = 'u32[144,128]{1,0:T(1,128)}', space=vmem, size = 0x12000, scoped, tag = 'internal scratch']
  %s0 = inlined_call_operand.vmem [shape: f32[8,784], index: 0, kind: input, shape index: {}]
  %s1 = inlined_call_operand.vmem [shape: f32[784,128], index: 1, kind: input, shape index: {}]
  %s2 = inlined_call_operand.vmem [shape: f32[1,128], index: 2, kind: input, shape index: {}]
  %s3 = inlined_call_operand.vmem [shape: f32[128,128], index: 3, kind: input, shape index: {}]
  %s4 = inlined_call_operand.vmem [shape: f32[1,128], index: 4, kind: input, shape index: {}]
  %s5 = inlined_call_operand.vmem [shape: f32[128,128], index: 5, kind: input, shape index: {}]
  %s6 = inlined_call_operand.vmem [shape: f32[1,128], index: 6, kind: input, shape index: {}]
  %s7 = inlined_call_operand.vmem [shape: f32[128,784], index: 7, kind: input, shape index: {}]
  %s8 = inlined_call_operand.vmem [shape: f32[1,784], index: 8, kind: input, shape index: {}]
  %s9 = inlined_call_operand.vmem [shape: f32[8,784], index: 9, kind: output, shape index: {}]
  %s10 = sld [smem:[#allocation0]]
  $region46: #{autoencoder_forward.1} parent=0
    _
  %s12 = ssub.s32 1, %s10
  %s13 = scalar_select 0, %s12, %s10
  // Predicated region
  $region2: #{autoencoder_forward.1} parent=0 // pred_check
    _
  $region3: #{autoencoder_forward.1} parent=0 // pred_check_branch
    %15 = sbr.rel (0) target = $region5
  $region4: #{autoencoder_forward.1} parent=0 // pred_region
    _
  $region5: #{autoencoder_forward.1} parent=0 // pred_fallthru
    _
  // Predicated region
  $region6: #{autoencoder_forward.1} parent=0 // pred_check
    _
  $region7: #{autoencoder_forward.1} parent=0 // pred_check_branch
    %17 = sbr.rel (0) target = $region9
  $region8: #{autoencoder_forward.1} parent=0 // pred_region
    _
  $region9: #{autoencoder_forward.1} parent=0 // pred_fallthru
    _
  // Predicated region
  $region10: #{autoencoder_forward.1} parent=0 // pred_check
    _
  $region11: #{autoencoder_forward.1} parent=0 // pred_check_branch
    %19 = sbr.rel (0) target = $region13
  $region12: #{autoencoder_forward.1} parent=0 // pred_region
    _
  $region13: #{autoencoder_forward.1} parent=0 // pred_fallthru
    _
  // Predicated region
  $region14: #{autoencoder_forward.1} parent=0 // pred_check
    _
  $region15: #{autoencoder_forward.1} parent=0 // pred_check_branch
    %21 = sbr.rel (0) target = $region17
  $region16: #{autoencoder_forward.1} parent=0 // pred_region
    _
  $region17: #{autoencoder_forward.1} parent=0 // pred_fallthru
    _
  // Predicated region
  $region18: #{autoencoder_forward.1} parent=0 // pred_check
    _
  $region19: #{autoencoder_forward.1} parent=0 // pred_check_branch
    %23 = sbr.rel (0) target = $region21
  $region20: #{autoencoder_forward.1} parent=0 // pred_region
    _
  $region21: #{autoencoder_forward.1} parent=0 // pred_fallthru
    _
  // Predicated region
  $region22: #{autoencoder_forward.1} parent=0 // pred_check
    _
  $region23: #{autoencoder_forward.1} parent=0 // pred_check_branch
    %25 = sbr.rel (0) target = $region25
  $region24: #{autoencoder_forward.1} parent=0 // pred_region
    _
  $region25: #{autoencoder_forward.1} parent=0 // pred_fallthru
    _
  // Predicated region
  $region26: #{autoencoder_forward.1} parent=0 // pred_check
    _
  $region27: #{autoencoder_forward.1} parent=0 // pred_check_branch
    %27 = sbr.rel (0) target = $region29
  $region28: #{autoencoder_forward.1} parent=0 // pred_region
    _
  $region29: #{autoencoder_forward.1} parent=0 // pred_fallthru
    _
  // Predicated region
  $region30: #{autoencoder_forward.1} parent=0 // pred_check
    _
  $region31: #{autoencoder_forward.1} parent=0 // pred_check_branch
    %29 = sbr.rel (0) target = $region33
  $region32: #{autoencoder_forward.1} parent=0 // pred_region
    _
  $region33: #{autoencoder_forward.1} parent=0 // pred_fallthru
    _
  // Predicated region
  $region34: #{autoencoder_forward.1} parent=0 // pred_check
    _
  $region35: #{autoencoder_forward.1} parent=0 // pred_check_branch
    %31 = sbr.rel (0) target = $region37
  $region36: #{autoencoder_forward.1} parent=0 // pred_region
    _
  $region37: #{autoencoder_forward.1} parent=0 // pred_fallthru
    _
  %v32 = vld [vmem:[%s0] sm:$0xff]
  %v33 = vld [vmem:[%s0 + $0x8] sm:$0xff]
  %v34 = vld [vmem:[%s0 + $0x10] sm:$0xff]
  %v35 = vld [vmem:[%s0 + $0x18] sm:$0xff]
  %v36 = vld [vmem:[%s0 + $0x20] sm:$0xff]
  %v37 = vld [vmem:[%s0 + $0x28] sm:$0xff]
  %v38 = vld [vmem:[%s0 + $0x30] sm:$0xff]
  %v39 = vld [vmem:[%s1] sm:$0xff]
  %v40 = vld [vmem:[%s1 + $0x8] sm:$0xff]
  %v41 = vld [vmem:[%s1 + $0x10] sm:$0xff]
  %v42 = vld [vmem:[%s1 + $0x18] sm:$0xff]
  %v43 = vld [vmem:[%s1 + $0x20] sm:$0xff]
  %v44 = vld [vmem:[%s1 + $0x28] sm:$0xff]
  %v45 = vld [vmem:[%s1 + $0x30] sm:$0xff]
  %v46 = vld [vmem:[%s1 + $0x38] sm:$0xff]
  %v47 = vld [vmem:[%s1 + $0x40] sm:$0xff]
  %v48 = vld [vmem:[%s1 + $0x48] sm:$0xff]
  %v49 = vld [vmem:[%s1 + $0x50] sm:$0xff]
  %v50 = vld [vmem:[%s1 + $0x58] sm:$0xff]
  %v51 = vld [vmem:[%s1 + $0x60] sm:$0xff]
  %v52 = vld [vmem:[%s1 + $0x68] sm:$0xff]
  %v53 = vld [vmem:[%s1 + $0x70] sm:$0xff]
  %v54 = vld [vmem:[%s1 + $0x78] sm:$0xff]
  %v55 = vld [vmem:[%s1 + $0x80] sm:$0xff]
  %v56 = vld [vmem:[%s1 + $0x88] sm:$0xff]
  %v57 = vld [vmem:[%s1 + $0x90] sm:$0xff]
  %v58 = vld [vmem:[%s1 + $0x98] sm:$0xff]
  %v59 = vld [vmem:[%s1 + $0xa0] sm:$0xff]
  %v60 = vld [vmem:[%s1 + $0xa8] sm:$0xff]
  %v61 = vld [vmem:[%s1 + $0xb0] sm:$0xff]
  %v62 = vld [vmem:[%s1 + $0xb8] sm:$0xff]
  %v63 = vld [vmem:[%s1 + $0xc0] sm:$0xff]
  %v64 = vld [vmem:[%s1 + $0xc8] sm:$0xff]
  %v65 = vld [vmem:[%s1 + $0xd0] sm:$0xff]
  %v66 = vld [vmem:[%s1 + $0xd8] sm:$0xff]
  %v67 = vld [vmem:[%s1 + $0xe0] sm:$0xff]
  %v68 = vld [vmem:[%s1 + $0xe8] sm:$0xff]
  %v69 = vld [vmem:[%s1 + $0xf0] sm:$0xff]
  %v70 = vld [vmem:[%s1 + $0xf8] sm:$0xff]
  %v71 = vld [vmem:[%s1 + $0x100] sm:$0xff]
  %v72 = vld [vmem:[%s1 + $0x108] sm:$0xff]
  %v73 = vld [vmem:[%s1 + $0x110] sm:$0xff]
  %v74 = vld [vmem:[%s1 + $0x118] sm:$0xff]
  %v75 = vld [vmem:[%s1 + $0x120] sm:$0xff]
  %v76 = vld [vmem:[%s1 + $0x128] sm:$0xff]
  %v77 = vld [vmem:[%s1 + $0x130] sm:$0xff]
  %v78 = vld [vmem:[%s1 + $0x138] sm:$0xff]
  %v79 = vld [vmem:[%s1 + $0x140] sm:$0xff]
  %v80 = vld [vmem:[%s1 + $0x148] sm:$0xff]
  %v81 = vld [vmem:[%s1 + $0x150] sm:$0xff]
  %v82 = vld [vmem:[%s1 + $0x158] sm:$0xff]
  %v83 = vld [vmem:[%s1 + $0x160] sm:$0xff]
  %v84 = vld [vmem:[%s1 + $0x168] sm:$0xff]
  %v85 = vld [vmem:[%s1 + $0x170] sm:$0xff]
  %v86 = vld [vmem:[%s1 + $0x178] sm:$0xff]
  %v87 = vld [vmem:[%s1 + $0x180] sm:$0xff]
  %v88 = vld [vmem:[%s1 + $0x188] sm:$0xff]
  %v89 = vld [vmem:[%s1 + $0x190] sm:$0xff]
  %v90 = vld [vmem:[%s1 + $0x198] sm:$0xff]
  %v91 = vld [vmem:[%s1 + $0x1a0] sm:$0xff]
  %v92 = vld [vmem:[%s1 + $0x1a8] sm:$0xff]
  %v93 = vld [vmem:[%s1 + $0x1b0] sm:$0xff]
  %v94 = vld [vmem:[%s1 + $0x1b8] sm:$0xff]
  %v95 = vld [vmem:[%s1 + $0x1c0] sm:$0xff]
  %v96 = vld [vmem:[%s1 + $0x1c8] sm:$0xff]
  %v97 = vld [vmem:[%s1 + $0x1d0] sm:$0xff]
  %v98 = vld [vmem:[%s1 + $0x1d8] sm:$0xff]
  %v99 = vld [vmem:[%s1 + $0x1e0] sm:$0xff]
  %v100 = vld [vmem:[%s1 + $0x1e8] sm:$0xff]
  %v101 = vld [vmem:[%s1 + $0x1f0] sm:$0xff]
  %v102 = vld [vmem:[%s1 + $0x1f8] sm:$0xff]
  %v103 = vld [vmem:[%s1 + $0x200] sm:$0xff]
  %v104 = vld [vmem:[%s1 + $0x208] sm:$0xff]
  %v105 = vld [vmem:[%s1 + $0x210] sm:$0xff]
  %v106 = vld [vmem:[%s1 + $0x218] sm:$0xff]
  %v107 = vld [vmem:[%s1 + $0x220] sm:$0xff]
  %v108 = vld [vmem:[%s1 + $0x228] sm:$0xff]
  %v109 = vld [vmem:[%s1 + $0x230] sm:$0xff]
  %v110 = vld [vmem:[%s1 + $0x238] sm:$0xff]
  %v111 = vld [vmem:[%s1 + $0x240] sm:$0xff]
  %v112 = vld [vmem:[%s1 + $0x248] sm:$0xff]
  %v113 = vld [vmem:[%s1 + $0x250] sm:$0xff]
  %v114 = vld [vmem:[%s1 + $0x258] sm:$0xff]
  %v115 = vld [vmem:[%s1 + $0x260] sm:$0xff]
  %v116 = vld [vmem:[%s1 + $0x268] sm:$0xff]
  %v117 = vld [vmem:[%s1 + $0x270] sm:$0xff]
  %v118 = vld [vmem:[%s1 + $0x278] sm:$0xff]
  %v119 = vld [vmem:[%s1 + $0x280] sm:$0xff]
  %v120 = vld [vmem:[%s1 + $0x288] sm:$0xff]
  %v121 = vld [vmem:[%s1 + $0x290] sm:$0xff]
  %v122 = vld [vmem:[%s1 + $0x298] sm:$0xff]
  %v123 = vld [vmem:[%s1 + $0x2a0] sm:$0xff]
  %v124 = vld [vmem:[%s1 + $0x2a8] sm:$0xff]
  %v125 = vld [vmem:[%s1 + $0x2b0] sm:$0xff]
  %v126 = vld [vmem:[%s1 + $0x2b8] sm:$0xff]
  %v127 = vld [vmem:[%s1 + $0x2c0] sm:$0xff]
  %v128 = vld [vmem:[%s1 + $0x2c8] sm:$0xff]
  %v129 = vld [vmem:[%s1 + $0x2d0] sm:$0xff]
  %v130 = vld [vmem:[%s1 + $0x2d8] sm:$0xff]
  %v131 = vld [vmem:[%s1 + $0x2e0] sm:$0xff]
  %v132 = vld [vmem:[%s1 + $0x2e8] sm:$0xff]
  %v133 = vld [vmem:[%s1 + $0x2f0] sm:$0xff]
  %v134 = vld [vmem:[%s1 + $0x2f8] sm:$0xff]
  %v135 = vld [vmem:[%s1 + $0x300] sm:$0xff]
  %v136 = vld [vmem:[%s1 + $0x308] sm:$0xff]
  %v137 = vld [vmem:[%s2] sm:$0x1]
  %v139 = vlaneseq
  %v140 = vshrl.u32 %v139, 7
  %v141 = vsub.s32 0, %v140
  %v142 = vrot.slane %v137, %v141
  %vm144 = vcmask 130048
  %v146 = vsel %vm144, %v38, 0
  %148 = vmatprep.subr.mxu0 0.0
  %149 = vmatpush1.msra.mxu0 %v39
  %150 = vmatprep.subr.mxu0 0.0
  %151 = vmatpush1.msra.mxu0 %v40
  %152 = vmatprep.subr.mxu0 0.0
  %153 = vmatpush1.msra.mxu0 %v41
  %154 = vmatprep.subr.mxu0 0.0
  %155 = vmatpush1.msra.mxu0 %v42
  %156 = vmatprep.subr.mxu0 0.0
  %157 = vmatpush1.msra.mxu0 %v43
  %158 = vmatprep.subr.mxu0 0.0
  %159 = vmatpush1.msra.mxu0 %v44
  %160 = vmatprep.subr.mxu0 0.0
  %161 = vmatpush1.msra.mxu0 %v45
  %162 = vmatprep.subr.mxu0 0.0
  %163 = vmatpush1.msra.mxu0 %v46
  %164 = vmatprep.subr.mxu0 0.0
  %165 = vmatpush1.msra.mxu0 %v47
  %166 = vmatprep.subr.mxu0 0.0
  %167 = vmatpush1.msra.mxu0 %v48
  %168 = vmatprep.subr.mxu0 0.0
  %169 = vmatpush1.msra.mxu0 %v49
  %170 = vmatprep.subr.mxu0 0.0
  %171 = vmatpush1.msra.mxu0 %v50
  %172 = vmatprep.subr.mxu0 0.0
  %173 = vmatpush1.msra.mxu0 %v51
  %174 = vmatprep.subr.mxu0 0.0
  %175 = vmatpush1.msra.mxu0 %v52
  %176 = vmatprep.subr.mxu0 0.0
  %177 = vmatpush1.msra.mxu0 %v53
  %178 = vmatprep.subr.mxu0 0.0
  %179 = vmatpush1.msra.mxu0 %v54
  %180 = vmatprep.subr.mxu0 0.0
  %181 = vmatpush1.msra.mxu0 %v55
  %182 = vmatprep.subr.mxu0 0.0
  %183 = vmatpush1.msra.mxu0 %v56
  %184 = vmatprep.subr.mxu0 0.0
  %185 = vmatpush1.msra.mxu0 %v57
  %186 = vmatprep.subr.mxu0 0.0
  %187 = vmatpush1.msra.mxu0 %v58
  %188 = vmatprep.subr.mxu0 0.0
  %189 = vmatpush1.msra.mxu0 %v59
  %190 = vmatprep.subr.mxu0 0.0
  %191 = vmatpush1.msra.mxu0 %v60
  %192 = vmatprep.subr.mxu0 0.0
  %193 = vmatpush1.msra.mxu0 %v61
  %194 = vmatprep.subr.mxu0 0.0
  %195 = vmatpush1.msra.mxu0 %v62
  %196 = vmatprep.subr.mxu0 0.0
  %197 = vmatpush1.msra.mxu0 %v63
  %198 = vmatprep.subr.mxu0 0.0
  %199 = vmatpush1.msra.mxu0 %v64
  %200 = vmatprep.subr.mxu0 0.0
  %201 = vmatpush1.msra.mxu0 %v65
  %202 = vmatprep.subr.mxu0 0.0
  %203 = vmatpush1.msra.mxu0 %v66
  %204 = vmatprep.subr.mxu0 0.0
  %205 = vmatpush1.msra.mxu0 %v67
  %206 = vmatprep.subr.mxu0 0.0
  %207 = vmatpush1.msra.mxu0 %v68
  %208 = vmatprep.subr.mxu0 0.0
  %209 = vmatpush1.msra.mxu0 %v69
  %210 = vmatprep.subr.mxu0 0.0
  %211 = vmatpush1.msra.mxu0 %v70
  %212 = vmatprep.mubr.f32.mxu0 %v33
  %213 = vmatmul.mubr.f32.gmra.mrb[0].mxu0 %v32
  %v214 = vpop.f32.mrb[0].mxu0
  %v215 = vadd.f32 %v142, %v214
  %v216 = vpop.f32.mrb[0].mxu0
  %217 = vdwg.mxu0
  %218 = vmatprep.subr.mxu0 0.0
  %219 = vmatpush1.msra.mxu0 %v71
  %220 = vmatprep.subr.mxu0 0.0
  %221 = vmatpush1.msra.mxu0 %v72
  %222 = vmatprep.subr.mxu0 0.0
  %223 = vmatpush1.msra.mxu0 %v73
  %224 = vmatprep.subr.mxu0 0.0
  %225 = vmatpush1.msra.mxu0 %v74
  %226 = vmatprep.subr.mxu0 0.0
  %227 = vmatpush1.msra.mxu0 %v75
  %228 = vmatprep.subr.mxu0 0.0
  %229 = vmatpush1.msra.mxu0 %v76
  %230 = vmatprep.subr.mxu0 0.0
  %231 = vmatpush1.msra.mxu0 %v77
  %232 = vmatprep.subr.mxu0 0.0
  %233 = vmatpush1.msra.mxu0 %v78
  %234 = vmatprep.subr.mxu0 0.0
  %235 = vmatpush1.msra.mxu0 %v79
  %236 = vmatprep.subr.mxu0 0.0
  %237 = vmatpush1.msra.mxu0 %v80
  %238 = vmatprep.subr.mxu0 0.0
  %239 = vmatpush1.msra.mxu0 %v81
  %240 = vmatprep.subr.mxu0 0.0
  %241 = vmatpush1.msra.mxu0 %v82
  %242 = vmatprep.subr.mxu0 0.0
  %243 = vmatpush1.msra.mxu0 %v83
  %244 = vmatprep.subr.mxu0 0.0
  %245 = vmatpush1.msra.mxu0 %v84
  %246 = vmatprep.subr.mxu0 0.0
  %247 = vmatpush1.msra.mxu0 %v85
  %248 = vmatprep.subr.mxu0 0.0
  %249 = vmatpush1.msra.mxu0 %v86
  %250 = vmatprep.subr.mxu0 0.0
  %251 = vmatpush1.msra.mxu0 %v87
  %252 = vmatprep.subr.mxu0 0.0
  %253 = vmatpush1.msra.mxu0 %v88
  %254 = vmatprep.subr.mxu0 0.0
  %255 = vmatpush1.msra.mxu0 %v89
  %256 = vmatprep.subr.mxu0 0.0
  %257 = vmatpush1.msra.mxu0 %v90
  %258 = vmatprep.subr.mxu0 0.0
  %259 = vmatpush1.msra.mxu0 %v91
  %260 = vmatprep.subr.mxu0 0.0
  %261 = vmatpush1.msra.mxu0 %v92
  %262 = vmatprep.subr.mxu0 0.0
  %263 = vmatpush1.msra.mxu0 %v93
  %264 = vmatprep.subr.mxu0 0.0
  %265 = vmatpush1.msra.mxu0 %v94
  %266 = vmatprep.subr.mxu0 0.0
  %267 = vmatpush1.msra.mxu0 %v95
  %268 = vmatprep.subr.mxu0 0.0
  %269 = vmatpush1.msra.mxu0 %v96
  %270 = vmatprep.subr.mxu0 0.0
  %271 = vmatpush1.msra.mxu0 %v97
  %272 = vmatprep.subr.mxu0 0.0
  %273 = vmatpush1.msra.mxu0 %v98
  %274 = vmatprep.subr.mxu0 0.0
  %275 = vmatpush1.msra.mxu0 %v99
  %276 = vmatprep.subr.mxu0 0.0
  %277 = vmatpush1.msra.mxu0 %v100
  %278 = vmatprep.subr.mxu0 0.0
  %279 = vmatpush1.msra.mxu0 %v101
  %280 = vmatprep.subr.mxu0 0.0
  %281 = vmatpush1.msra.mxu0 %v102
  %282 = vmatprep.mubr.f32.mxu0 %v35
  %283 = vmatmul.mubr.f32.gmra.mrb[0].mxu0 %v34
  %v284 = vpop.f32.mrb[0].mxu0
  %v285 = vadd.f32 %v215, %v284
  %v286 = vpop.f32.mrb[0].mxu0
  %287 = vdwg.mxu0
  %288 = vmatprep.subr.mxu0 0.0
  %289 = vmatpush1.msra.mxu0 %v103
  %290 = vmatprep.subr.mxu0 0.0
  %291 = vmatpush1.msra.mxu0 %v104
  %292 = vmatprep.subr.mxu0 0.0
  %293 = vmatpush1.msra.mxu0 %v105
  %294 = vmatprep.subr.mxu0 0.0
  %295 = vmatpush1.msra.mxu0 %v106
  %296 = vmatprep.subr.mxu0 0.0
  %297 = vmatpush1.msra.mxu0 %v107
  %298 = vmatprep.subr.mxu0 0.0
  %299 = vmatpush1.msra.mxu0 %v108
  %300 = vmatprep.subr.mxu0 0.0
  %301 = vmatpush1.msra.mxu0 %v109
  %302 = vmatprep.subr.mxu0 0.0
  %303 = vmatpush1.msra.mxu0 %v110
  %304 = vmatprep.subr.mxu0 0.0
  %305 = vmatpush1.msra.mxu0 %v111
  %306 = vmatprep.subr.mxu0 0.0
  %307 = vmatpush1.msra.mxu0 %v112
  %308 = vmatprep.subr.mxu0 0.0
  %309 = vmatpush1.msra.mxu0 %v113
  %310 = vmatprep.subr.mxu0 0.0
  %311 = vmatpush1.msra.mxu0 %v114
  %312 = vmatprep.subr.mxu0 0.0
  %313 = vmatpush1.msra.mxu0 %v115
  %314 = vmatprep.subr.mxu0 0.0
  %315 = vmatpush1.msra.mxu0 %v116
  %316 = vmatprep.subr.mxu0 0.0
  %317 = vmatpush1.msra.mxu0 %v117
  %318 = vmatprep.subr.mxu0 0.0
  %319 = vmatpush1.msra.mxu0 %v118
  %320 = vmatprep.subr.mxu0 0.0
  %321 = vmatpush1.msra.mxu0 %v119
  %322 = vmatprep.subr.mxu0 0.0
  %323 = vmatpush1.msra.mxu0 %v120
  %324 = vmatprep.subr.mxu0 0.0
  %325 = vmatpush1.msra.mxu0 %v121
  %326 = vmatprep.subr.mxu0 0.0
  %327 = vmatpush1.msra.mxu0 %v122
  %328 = vmatprep.subr.mxu0 0.0
  %329 = vmatpush1.msra.mxu0 %v123
  %330 = vmatprep.subr.mxu0 0.0
  %331 = vmatpush1.msra.mxu0 %v124
  %332 = vmatprep.subr.mxu0 0.0
  %333 = vmatpush1.msra.mxu0 %v125
  %334 = vmatprep.subr.mxu0 0.0
  %335 = vmatpush1.msra.mxu0 %v126
  %336 = vmatprep.subr.mxu0 0.0
  %337 = vmatpush1.msra.mxu0 %v127
  %338 = vmatprep.subr.mxu0 0.0
  %339 = vmatpush1.msra.mxu0 %v128
  %340 = vmatprep.subr.mxu0 0.0
  %341 = vmatpush1.msra.mxu0 %v129
  %342 = vmatprep.subr.mxu0 0.0
  %343 = vmatpush1.msra.mxu0 %v130
  %344 = vmatprep.subr.mxu0 0.0
  %345 = vmatpush1.msra.mxu0 %v131
  %346 = vmatprep.subr.mxu0 0.0
  %347 = vmatpush1.msra.mxu0 %v132
  %348 = vmatprep.subr.mxu0 0.0
  %349 = vmatpush1.msra.mxu0 %v133
  %350 = vmatprep.subr.mxu0 0.0
  %351 = vmatpush1.msra.mxu0 %v134
  %352 = vmatprep.mubr.f32.mxu0 %v37
  %353 = vmatmul.mubr.f32.gmra.mrb[0].mxu0 %v36
  %v354 = vpop.f32.mrb[0].mxu0
  %v355 = vadd.f32 %v285, %v354
  %v356 = vpop.f32.mrb[0].mxu0
  %357 = vdwg.mxu0
  %358 = vmatprep.subr.mxu0 0.0
  %359 = vmatpush1.msra.mxu0 %v135
  %360 = vmatprep.subr.mxu0 0.0
  %361 = vmatpush1.msra.mxu0 %v136
  %362 = vmatprep.subr.mxu0 0.0
  %363 = vmatpush1.msra.mxu0 0.0
  %364 = vmatprep.subr.mxu0 0.0
  %365 = vmatpush1.msra.mxu0 0.0
  %366 = vmatprep.subr.mxu0 0.0
  %367 = vmatpush1.msra.mxu0 0.0
  %368 = vmatprep.subr.mxu0 0.0
  %369 = vmatpush1.msra.mxu0 0.0
  %370 = vmatprep.subr.mxu0 0.0
  %371 = vmatpush1.msra.mxu0 0.0
  %372 = vmatprep.subr.mxu0 0.0
  %373 = vmatpush1.msra.mxu0 0.0
  %374 = vmatprep.subr.mxu0 0.0
  %375 = vmatpush1.msra.mxu0 0.0
  %376 = vmatprep.subr.mxu0 0.0
  %377 = vmatpush1.msra.mxu0 0.0
  %378 = vmatprep.subr.mxu0 0.0
  %379 = vmatpush1.msra.mxu0 0.0
  %380 = vmatprep.subr.mxu0 0.0
  %381 = vmatpush1.msra.mxu0 0.0
  %382 = vmatprep.subr.mxu0 0.0
  %383 = vmatpush1.msra.mxu0 0.0
  %384 = vmatprep.subr.mxu0 0.0
  %385 = vmatpush1.msra.mxu0 0.0
  %386 = vmatprep.subr.mxu0 0.0
  %387 = vmatpush1.msra.mxu0 0.0
  %388 = vmatprep.subr.mxu0 0.0
  %389 = vmatpush1.msra.mxu0 0.0
  %390 = vmatprep.subr.mxu0 0.0
  %391 = vmatpush1.msra.mxu0 0.0
  %392 = vmatprep.subr.mxu0 0.0
  %393 = vmatpush1.msra.mxu0 0.0
  %394 = vmatprep.subr.mxu0 0.0
  %395 = vmatpush1.msra.mxu0 0.0
  %396 = vmatprep.subr.mxu0 0.0
  %397 = vmatpush1.msra.mxu0 0.0
  %398 = vmatprep.subr.mxu0 0.0
  %399 = vmatpush1.msra.mxu0 0.0
  %400 = vmatprep.subr.mxu0 0.0
  %401 = vmatpush1.msra.mxu0 0.0
  %402 = vmatprep.subr.mxu0 0.0
  %403 = vmatpush1.msra.mxu0 0.0
  %404 = vmatprep.subr.mxu0 0.0
  %405 = vmatpush1.msra.mxu0 0.0
  %406 = vmatprep.subr.mxu0 0.0
  %407 = vmatpush1.msra.mxu0 0.0
  %408 = vmatprep.subr.mxu0 0.0
  %409 = vmatpush1.msra.mxu0 0.0
  %410 = vmatprep.subr.mxu0 0.0
  %411 = vmatpush1.msra.mxu0 0.0
  %412 = vmatprep.subr.mxu0 0.0
  %413 = vmatpush1.msra.mxu0 0.0
  %414 = vmatprep.subr.mxu0 0.0
  %415 = vmatpush1.msra.mxu0 0.0
  %416 = vmatprep.subr.mxu0 0.0
  %417 = vmatpush1.msra.mxu0 0.0
  %418 = vmatprep.subr.mxu0 0.0
  %419 = vmatpush1.msra.mxu0 0.0
  %420 = vmatprep.subr.mxu0 0.0
  %421 = vmatpush1.msra.mxu0 0.0
  %422 = vmatprep.mubr.f32.mxu0 0.0
  %423 = vmatmul.mubr.f32.gmra.mrb[0].mxu0 %v146
  %v424 = vpop.f32.mrb[0].mxu0
  %v425 = vadd.f32 %v355, %v424
  %v426 = vpop.f32.mrb[0].mxu0
  %427 = vdwg.mxu0
  %v428 = vmax.f32 %v425, 0.0
  %v429 = vld [vmem:[%s3] sm:$0xff]
  %v430 = vld [vmem:[%s3 + $0x8] sm:$0xff]
  %v431 = vld [vmem:[%s3 + $0x10] sm:$0xff]
  %v432 = vld [vmem:[%s3 + $0x18] sm:$0xff]
  %v433 = vld [vmem:[%s3 + $0x20] sm:$0xff]
  %v434 = vld [vmem:[%s3 + $0x28] sm:$0xff]
  %v435 = vld [vmem:[%s3 + $0x30] sm:$0xff]
  %v436 = vld [vmem:[%s3 + $0x38] sm:$0xff]
  %v437 = vld [vmem:[%s3 + $0x40] sm:$0xff]
  %v438 = vld [vmem:[%s3 + $0x48] sm:$0xff]
  %v439 = vld [vmem:[%s3 + $0x50] sm:$0xff]
  %v440 = vld [vmem:[%s3 + $0x58] sm:$0xff]
  %v441 = vld [vmem:[%s3 + $0x60] sm:$0xff]
  %v442 = vld [vmem:[%s3 + $0x68] sm:$0xff]
  %v443 = vld [vmem:[%s3 + $0x70] sm:$0xff]
  %v444 = vld [vmem:[%s3 + $0x78] sm:$0xff]
  %v445 = vld [vmem:[%s4] sm:$0x1]
  %v447 = vlaneseq
  %v448 = vshrl.u32 %v447, 7
  %v449 = vsub.s32 0, %v448
  %v450 = vrot.slane %v445, %v449
  %452 = vmatprep.subr.mxu0 0.0
  %453 = vmatpush1.msra.mxu0 %v429
  %454 = vmatprep.subr.mxu0 0.0
  %455 = vmatpush1.msra.mxu0 %v430
  %456 = vmatprep.subr.mxu0 0.0
  %457 = vmatpush1.msra.mxu0 %v431
  %458 = vmatprep.subr.mxu0 0.0
  %459 = vmatpush1.msra.mxu0 %v432
  %460 = vmatprep.subr.mxu0 0.0
  %461 = vmatpush1.msra.mxu0 %v433
  %462 = vmatprep.subr.mxu0 0.0
  %463 = vmatpush1.msra.mxu0 %v434
  %464 = vmatprep.subr.mxu0 0.0
  %465 = vmatpush1.msra.mxu0 %v435
  %466 = vmatprep.subr.mxu0 0.0
  %467 = vmatpush1.msra.mxu0 %v436
  %468 = vmatprep.subr.mxu0 0.0
  %469 = vmatpush1.msra.mxu0 %v437
  %470 = vmatprep.subr.mxu0 0.0
  %471 = vmatpush1.msra.mxu0 %v438
  %472 = vmatprep.subr.mxu0 0.0
  %473 = vmatpush1.msra.mxu0 %v439
  %474 = vmatprep.subr.mxu0 0.0
  %475 = vmatpush1.msra.mxu0 %v440
  %476 = vmatprep.subr.mxu0 0.0
  %477 = vmatpush1.msra.mxu0 %v441
  %478 = vmatprep.subr.mxu0 0.0
  %479 = vmatpush1.msra.mxu0 %v442
  %480 = vmatprep.subr.mxu0 0.0
  %481 = vmatpush1.msra.mxu0 %v443
  %482 = vmatprep.subr.mxu0 0.0
  %483 = vmatpush1.msra.mxu0 %v444
  %484 = vmatprep.subr.mxu0 0.0
  %485 = vmatpush1.msra.mxu0 0.0
  %486 = vmatprep.subr.mxu0 0.0
  %487 = vmatpush1.msra.mxu0 0.0
  %488 = vmatprep.subr.mxu0 0.0
  %489 = vmatpush1.msra.mxu0 0.0
  %490 = vmatprep.subr.mxu0 0.0
  %491 = vmatpush1.msra.mxu0 0.0
  %492 = vmatprep.subr.mxu0 0.0
  %493 = vmatpush1.msra.mxu0 0.0
  %494 = vmatprep.subr.mxu0 0.0
  %495 = vmatpush1.msra.mxu0 0.0
  %496 = vmatprep.subr.mxu0 0.0
  %497 = vmatpush1.msra.mxu0 0.0
  %498 = vmatprep.subr.mxu0 0.0
  %499 = vmatpush1.msra.mxu0 0.0
  %500 = vmatprep.subr.mxu0 0.0
  %501 = vmatpush1.msra.mxu0 0.0
  %502 = vmatprep.subr.mxu0 0.0
  %503 = vmatpush1.msra.mxu0 0.0
  %504 = vmatprep.subr.mxu0 0.0
  %505 = vmatpush1.msra.mxu0 0.0
  %506 = vmatprep.subr.mxu0 0.0
  %507 = vmatpush1.msra.mxu0 0.0
  %508 = vmatprep.subr.mxu0 0.0
  %509 = vmatpush1.msra.mxu0 0.0
  %510 = vmatprep.subr.mxu0 0.0
  %511 = vmatpush1.msra.mxu0 0.0
  %512 = vmatprep.subr.mxu0 0.0
  %513 = vmatpush1.msra.mxu0 0.0
  %514 = vmatprep.subr.mxu0 0.0
  %515 = vmatpush1.msra.mxu0 0.0
  %516 = vmatprep.mubr.f32.mxu0 0.0
  %517 = vmatmul.mubr.f32.gmra.mrb[0].mxu0 %v428
  %v518 = vpop.f32.mrb[0].mxu0
  %v519 = vadd.f32 %v450, %v518
  %v520 = vpop.f32.mrb[0].mxu0
  %521 = vdwg.mxu0
  %v522 = vmax.f32 %v519, 0.0
  %v523 = vld [vmem:[%s5] sm:$0xff]
  %v524 = vld [vmem:[%s5 + $0x8] sm:$0xff]
  %v525 = vld [vmem:[%s5 + $0x10] sm:$0xff]
  %v526 = vld [vmem:[%s5 + $0x18] sm:$0xff]
  %v527 = vld [vmem:[%s5 + $0x20] sm:$0xff]
  %v528 = vld [vmem:[%s5 + $0x28] sm:$0xff]
  %v529 = vld [vmem:[%s5 + $0x30] sm:$0xff]
  %v530 = vld [vmem:[%s5 + $0x38] sm:$0xff]
  %v531 = vld [vmem:[%s5 + $0x40] sm:$0xff]
  %v532 = vld [vmem:[%s5 + $0x48] sm:$0xff]
  %v533 = vld [vmem:[%s5 + $0x50] sm:$0xff]
  %v534 = vld [vmem:[%s5 + $0x58] sm:$0xff]
  %v535 = vld [vmem:[%s5 + $0x60] sm:$0xff]
  %v536 = vld [vmem:[%s5 + $0x68] sm:$0xff]
  %v537 = vld [vmem:[%s5 + $0x70] sm:$0xff]
  %v538 = vld [vmem:[%s5 + $0x78] sm:$0xff]
  %v539 = vld [vmem:[%s6] sm:$0x1]
  %v541 = vlaneseq
  %v542 = vshrl.u32 %v541, 7
  %v543 = vsub.s32 0, %v542
  %v544 = vrot.slane %v539, %v543
  %546 = vmatprep.subr.mxu0 0.0
  %547 = vmatpush1.msra.mxu0 %v523
  %548 = vmatprep.subr.mxu0 0.0
  %549 = vmatpush1.msra.mxu0 %v524
  %550 = vmatprep.subr.mxu0 0.0
  %551 = vmatpush1.msra.mxu0 %v525
  %552 = vmatprep.subr.mxu0 0.0
  %553 = vmatpush1.msra.mxu0 %v526
  %554 = vmatprep.subr.mxu0 0.0
  %555 = vmatpush1.msra.mxu0 %v527
  %556 = vmatprep.subr.mxu0 0.0
  %557 = vmatpush1.msra.mxu0 %v528
  %558 = vmatprep.subr.mxu0 0.0
  %559 = vmatpush1.msra.mxu0 %v529
  %560 = vmatprep.subr.mxu0 0.0
  %561 = vmatpush1.msra.mxu0 %v530
  %562 = vmatprep.subr.mxu0 0.0
  %563 = vmatpush1.msra.mxu0 %v531
  %564 = vmatprep.subr.mxu0 0.0
  %565 = vmatpush1.msra.mxu0 %v532
  %566 = vmatprep.subr.mxu0 0.0
  %567 = vmatpush1.msra.mxu0 %v533
  %568 = vmatprep.subr.mxu0 0.0
  %569 = vmatpush1.msra.mxu0 %v534
  %570 = vmatprep.subr.mxu0 0.0
  %571 = vmatpush1.msra.mxu0 %v535
  %572 = vmatprep.subr.mxu0 0.0
  %573 = vmatpush1.msra.mxu0 %v536
  %574 = vmatprep.subr.mxu0 0.0
  %575 = vmatpush1.msra.mxu0 %v537
  %576 = vmatprep.subr.mxu0 0.0
  %577 = vmatpush1.msra.mxu0 %v538
  %578 = vmatprep.subr.mxu0 0.0
  %579 = vmatpush1.msra.mxu0 0.0
  %580 = vmatprep.subr.mxu0 0.0
  %581 = vmatpush1.msra.mxu0 0.0
  %582 = vmatprep.subr.mxu0 0.0
  %583 = vmatpush1.msra.mxu0 0.0
  %584 = vmatprep.subr.mxu0 0.0
  %585 = vmatpush1.msra.mxu0 0.0
  %586 = vmatprep.subr.mxu0 0.0
  %587 = vmatpush1.msra.mxu0 0.0
  %588 = vmatprep.subr.mxu0 0.0
  %589 = vmatpush1.msra.mxu0 0.0
  %590 = vmatprep.subr.mxu0 0.0
  %591 = vmatpush1.msra.mxu0 0.0
  %592 = vmatprep.subr.mxu0 0.0
  %593 = vmatpush1.msra.mxu0 0.0
  %594 = vmatprep.subr.mxu0 0.0
  %595 = vmatpush1.msra.mxu0 0.0
  %596 = vmatprep.subr.mxu0 0.0
  %597 = vmatpush1.msra.mxu0 0.0
  %598 = vmatprep.subr.mxu0 0.0
  %599 = vmatpush1.msra.mxu0 0.0
  %600 = vmatprep.subr.mxu0 0.0
  %601 = vmatpush1.msra.mxu0 0.0
  %602 = vmatprep.subr.mxu0 0.0
  %603 = vmatpush1.msra.mxu0 0.0
  %604 = vmatprep.subr.mxu0 0.0
  %605 = vmatpush1.msra.mxu0 0.0
  %606 = vmatprep.subr.mxu0 0.0
  %607 = vmatpush1.msra.mxu0 0.0
  %608 = vmatprep.subr.mxu0 0.0
  %609 = vmatpush1.msra.mxu0 0.0
  %610 = vmatprep.mubr.f32.mxu0 0.0
  %611 = vmatmul.mubr.f32.gmra.mrb[0].mxu0 %v522
  %v612 = vpop.f32.mrb[0].mxu0
  %v613 = vadd.f32 %v544, %v612
  %v614 = vpop.f32.mrb[0].mxu0
  %615 = vdwg.mxu0
  %v616 = vmax.f32 %v613, 0.0
  %v617 = vld [vmem:[%s7] sm:$0xff]
  %v618 = vld [vmem:[%s7 + $0x8] sm:$0xff]
  %v619 = vld [vmem:[%s7 + $0x10] sm:$0xff]
  %v620 = vld [vmem:[%s7 + $0x18] sm:$0xff]
  %v621 = vld [vmem:[%s7 + $0x20] sm:$0xff]
  %v622 = vld [vmem:[%s7 + $0x28] sm:$0xff]
  %v623 = vld [vmem:[%s7 + $0x30] sm:$0xff]
  %v624 = vld [vmem:[%s7 + $0x38] sm:$0xff]
  %v625 = vld [vmem:[%s7 + $0x40] sm:$0xff]
  %v626 = vld [vmem:[%s7 + $0x48] sm:$0xff]
  %v627 = vld [vmem:[%s7 + $0x50] sm:$0xff]
  %v628 = vld [vmem:[%s7 + $0x58] sm:$0xff]
  %v629 = vld [vmem:[%s7 + $0x60] sm:$0xff]
  %v630 = vld [vmem:[%s7 + $0x68] sm:$0xff]
  %v631 = vld [vmem:[%s7 + $0x70] sm:$0xff]
  %v632 = vld [vmem:[%s7 + $0x78] sm:$0xff]
  %v633 = vld [vmem:[%s7 + $0x80] sm:$0xff]
  %v634 = vld [vmem:[%s7 + $0x88] sm:$0xff]
  %v635 = vld [vmem:[%s7 + $0x90] sm:$0xff]
  %v636 = vld [vmem:[%s7 + $0x98] sm:$0xff]
  %v637 = vld [vmem:[%s7 + $0xa0] sm:$0xff]
  %v638 = vld [vmem:[%s7 + $0xa8] sm:$0xff]
  %v639 = vld [vmem:[%s7 + $0xb0] sm:$0xff]
  %v640 = vld [vmem:[%s7 + $0xb8] sm:$0xff]
  %v641 = vld [vmem:[%s7 + $0xc0] sm:$0xff]
  %v642 = vld [vmem:[%s7 + $0xc8] sm:$0xff]
  %v643 = vld [vmem:[%s7 + $0xd0] sm:$0xff]
  %v644 = vld [vmem:[%s7 + $0xd8] sm:$0xff]
  %v645 = vld [vmem:[%s7 + $0xe0] sm:$0xff]
  %v646 = vld [vmem:[%s7 + $0xe8] sm:$0xff]
  %v647 = vld [vmem:[%s7 + $0xf0] sm:$0xff]
  %v648 = vld [vmem:[%s7 + $0xf8] sm:$0xff]
  %v649 = vld [vmem:[%s7 + $0x100] sm:$0xff]
  %v650 = vld [vmem:[%s7 + $0x108] sm:$0xff]
  %v651 = vld [vmem:[%s7 + $0x110] sm:$0xff]
  %v652 = vld [vmem:[%s7 + $0x118] sm:$0xff]
  %v653 = vld [vmem:[%s7 + $0x120] sm:$0xff]
  %v654 = vld [vmem:[%s7 + $0x128] sm:$0xff]
  %v655 = vld [vmem:[%s7 + $0x130] sm:$0xff]
  %v656 = vld [vmem:[%s7 + $0x138] sm:$0xff]
  %v657 = vld [vmem:[%s7 + $0x140] sm:$0xff]
  %v658 = vld [vmem:[%s7 + $0x148] sm:$0xff]
  %v659 = vld [vmem:[%s7 + $0x150] sm:$0xff]
  %v660 = vld [vmem:[%s7 + $0x158] sm:$0xff]
  %v661 = vld [vmem:[%s7 + $0x160] sm:$0xff]
  %v662 = vld [vmem:[%s7 + $0x168] sm:$0xff]
  %v663 = vld [vmem:[%s7 + $0x170] sm:$0xff]
  %v664 = vld [vmem:[%s7 + $0x178] sm:$0xff]
  %v665 = vld [vmem:[%s7 + $0x180] sm:$0xff]
  %v666 = vld [vmem:[%s7 + $0x188] sm:$0xff]
  %v667 = vld [vmem:[%s7 + $0x190] sm:$0xff]
  %v668 = vld [vmem:[%s7 + $0x198] sm:$0xff]
  %v669 = vld [vmem:[%s7 + $0x1a0] sm:$0xff]
  %v670 = vld [vmem:[%s7 + $0x1a8] sm:$0xff]
  %v671 = vld [vmem:[%s7 + $0x1b0] sm:$0xff]
  %v672 = vld [vmem:[%s7 + $0x1b8] sm:$0xff]
  %v673 = vld [vmem:[%s7 + $0x1c0] sm:$0xff]
  %v674 = vld [vmem:[%s7 + $0x1c8] sm:$0xff]
  %v675 = vld [vmem:[%s7 + $0x1d0] sm:$0xff]
  %v676 = vld [vmem:[%s7 + $0x1d8] sm:$0xff]
  %v677 = vld [vmem:[%s7 + $0x1e0] sm:$0xff]
  %v678 = vld [vmem:[%s7 + $0x1e8] sm:$0xff]
  %v679 = vld [vmem:[%s7 + $0x1f0] sm:$0xff]
  %v680 = vld [vmem:[%s7 + $0x1f8] sm:$0xff]
  %v681 = vld [vmem:[%s7 + $0x200] sm:$0xff]
  %v682 = vld [vmem:[%s7 + $0x208] sm:$0xff]
  %v683 = vld [vmem:[%s7 + $0x210] sm:$0xff]
  %v684 = vld [vmem:[%s7 + $0x218] sm:$0xff]
  %v685 = vld [vmem:[%s7 + $0x220] sm:$0xff]
  %v686 = vld [vmem:[%s7 + $0x228] sm:$0xff]
  %v687 = vld [vmem:[%s7 + $0x230] sm:$0xff]
  %v688 = vld [vmem:[%s7 + $0x238] sm:$0xff]
  %v689 = vld [vmem:[%s7 + $0x240] sm:$0xff]
  %v690 = vld [vmem:[%s7 + $0x248] sm:$0xff]
  %v691 = vld [vmem:[%s7 + $0x250] sm:$0xff]
  %v692 = vld [vmem:[%s7 + $0x258] sm:$0xff]
  %v693 = vld [vmem:[%s7 + $0x260] sm:$0xff]
  %v694 = vld [vmem:[%s7 + $0x268] sm:$0xff]
  %v695 = vld [vmem:[%s7 + $0x270] sm:$0xff]
  %v696 = vld [vmem:[%s7 + $0x278] sm:$0xff]
  %v697 = vld [vmem:[%s7 + $0x280] sm:$0xff]
  %v698 = vld [vmem:[%s7 + $0x288] sm:$0xff]
  %v699 = vld [vmem:[%s7 + $0x290] sm:$0xff]
  %v700 = vld [vmem:[%s7 + $0x298] sm:$0xff]
  %v701 = vld [vmem:[%s7 + $0x2a0] sm:$0xff]
  %v702 = vld [vmem:[%s7 + $0x2a8] sm:$0xff]
  %v703 = vld [vmem:[%s7 + $0x2b0] sm:$0xff]
  %v704 = vld [vmem:[%s7 + $0x2b8] sm:$0xff]
  %v705 = vld [vmem:[%s7 + $0x2c0] sm:$0xff]
  %v706 = vld [vmem:[%s7 + $0x2c8] sm:$0xff]
  %v707 = vld [vmem:[%s7 + $0x2d0] sm:$0xff]
  %v708 = vld [vmem:[%s7 + $0x2d8] sm:$0xff]
  %v709 = vld [vmem:[%s7 + $0x2e0] sm:$0xff]
  %v710 = vld [vmem:[%s7 + $0x2e8] sm:$0xff]
  %v711 = vld [vmem:[%s7 + $0x2f0] sm:$0xff]
  %v712 = vld [vmem:[%s7 + $0x2f8] sm:$0xff]
  %v713 = vld [vmem:[%s7 + $0x300] sm:$0xff]
  %v714 = vld [vmem:[%s7 + $0x308] sm:$0xff]
  %v715 = vld [vmem:[%s7 + $0x310] sm:$0xff]
  %v716 = vld [vmem:[%s7 + $0x318] sm:$0xff]
  %v717 = vld [vmem:[%s7 + $0x320] sm:$0xff]
  %v718 = vld [vmem:[%s7 + $0x328] sm:$0xff]
  %v719 = vld [vmem:[%s7 + $0x330] sm:$0xff]
  %v720 = vld [vmem:[%s7 + $0x338] sm:$0xff]
  %v721 = vld [vmem:[%s7 + $0x340] sm:$0xff]
  %v722 = vld [vmem:[%s7 + $0x348] sm:$0xff]
  %v723 = vld [vmem:[%s7 + $0x350] sm:$0xff]
  %v724 = vld [vmem:[%s7 + $0x358] sm:$0xff]
  %v725 = vld [vmem:[%s7 + $0x360] sm:$0xff]
  %v726 = vld [vmem:[%s7 + $0x368] sm:$0xff]
  %v727 = vld [vmem:[%s7 + $0x370] sm:$0xff]
  %v728 = vld [vmem:[%s7 + $0x378] sm:$0xff]
  %v729 = vld [vmem:[%s8] sm:$0x7f]
  %v731 = vlaneseq
  %v732 = vshrl.u32 %v731, 7
  %v733 = vsub.s32 0, %v732
  %v734 = vrot.slane %v729, %v733
  %v735 = vlaneseq
  %v736 = vshrl.u32 %v735, 7
  %v737 = vsub.s32 1, %v736
  %v738 = vrot.slane %v729, %v737
  %v739 = vlaneseq
  %v740 = vshrl.u32 %v739, 7
  %v741 = vsub.s32 2, %v740
  %v742 = vrot.slane %v729, %v741
  %v743 = vlaneseq
  %v744 = vshrl.u32 %v743, 7
  %v745 = vsub.s32 3, %v744
  %v746 = vrot.slane %v729, %v745
  %v747 = vlaneseq
  %v748 = vshrl.u32 %v747, 7
  %v749 = vsub.s32 4, %v748
  %v750 = vrot.slane %v729, %v749
  %v751 = vlaneseq
  %v752 = vshrl.u32 %v751, 7
  %v753 = vsub.s32 5, %v752
  %v754 = vrot.slane %v729, %v753
  %v755 = vlaneseq
  %v756 = vshrl.u32 %v755, 7
  %v757 = vsub.s32 6, %v756
  %v758 = vrot.slane %v729, %v757
  %766 = vmatprep.subr.mxu0 %v618
  %767 = vmatpush1.msra.mxu0 %v617
  %768 = vmatprep.subr.mxu0 %v625
  %769 = vmatpush1.msra.mxu0 %v624
  %770 = vmatprep.subr.mxu0 %v632
  %771 = vmatpush1.msra.mxu0 %v631
  %772 = vmatprep.subr.mxu0 %v639
  %773 = vmatpush1.msra.mxu0 %v638
  %774 = vmatprep.subr.mxu0 %v646
  %775 = vmatpush1.msra.mxu0 %v645
  %776 = vmatprep.subr.mxu0 %v653
  %777 = vmatpush1.msra.mxu0 %v652
  %778 = vmatprep.subr.mxu0 %v660
  %779 = vmatpush1.msra.mxu0 %v659
  %780 = vmatprep.subr.mxu0 %v667
  %781 = vmatpush1.msra.mxu0 %v666
  %782 = vmatprep.subr.mxu0 %v674
  %783 = vmatpush1.msra.mxu0 %v673
  %784 = vmatprep.subr.mxu0 %v681
  %785 = vmatpush1.msra.mxu0 %v680
  %786 = vmatprep.subr.mxu0 %v688
  %787 = vmatpush1.msra.mxu0 %v687
  %788 = vmatprep.subr.mxu0 %v695
  %789 = vmatpush1.msra.mxu0 %v694
  %790 = vmatprep.subr.mxu0 %v702
  %791 = vmatpush1.msra.mxu0 %v701
  %792 = vmatprep.subr.mxu0 %v709
  %793 = vmatpush1.msra.mxu0 %v708
  %794 = vmatprep.subr.mxu0 %v716
  %795 = vmatpush1.msra.mxu0 %v715
  %796 = vmatprep.subr.mxu0 %v723
  %797 = vmatpush1.msra.mxu0 %v722
  %798 = vmatprep.subr.mxu0 0.0
  %799 = vmatpush1.msra.mxu0 0.0
  %800 = vmatprep.subr.mxu0 0.0
  %801 = vmatpush1.msra.mxu0 0.0
  %802 = vmatprep.subr.mxu0 0.0
  %803 = vmatpush1.msra.mxu0 0.0
  %804 = vmatprep.subr.mxu0 0.0
  %805 = vmatpush1.msra.mxu0 0.0
  %806 = vmatprep.subr.mxu0 0.0
  %807 = vmatpush1.msra.mxu0 0.0
  %808 = vmatprep.subr.mxu0 0.0
  %809 = vmatpush1.msra.mxu0 0.0
  %810 = vmatprep.subr.mxu0 0.0
  %811 = vmatpush1.msra.mxu0 0.0
  %812 = vmatprep.subr.mxu0 0.0
  %813 = vmatpush1.msra.mxu0 0.0
  %814 = vmatprep.subr.mxu0 0.0
  %815 = vmatpush1.msra.mxu0 0.0
  %816 = vmatprep.subr.mxu0 0.0
  %817 = vmatpush1.msra.mxu0 0.0
  %818 = vmatprep.subr.mxu0 0.0
  %819 = vmatpush1.msra.mxu0 0.0
  %820 = vmatprep.subr.mxu0 0.0
  %821 = vmatpush1.msra.mxu0 0.0
  %822 = vmatprep.subr.mxu0 0.0
  %823 = vmatpush1.msra.mxu0 0.0
  %824 = vmatprep.subr.mxu0 0.0
  %825 = vmatpush1.msra.mxu0 0.0
  %826 = vmatprep.subr.mxu0 0.0
  %827 = vmatpush1.msra.mxu0 0.0
  %828 = vmatprep.subr.mxu0 0.0
  %829 = vmatpush1.msra.mxu0 0.0
  %830 = vmatprep.mubr.f32.mxu0 0.0
  %831 = vmatmul.mubr.f32.gmra.mrb[0].mxu0 %v616
  %v832 = vpop.f32.mrb[0].mxu0
  %v833 = vadd.f32 %v734, %v832
  %v834 = vpop.f32.mrb[0].mxu0
  %v835 = vadd.f32 %v738, %v834
  %836 = vdwg.mxu0
  %837 = vmatprep.subr.mxu0 %v620
  %838 = vmatpush1.msra.mxu0 %v619
  %839 = vmatprep.subr.mxu0 %v627
  %840 = vmatpush1.msra.mxu0 %v626
  %841 = vmatprep.subr.mxu0 %v634
  %842 = vmatpush1.msra.mxu0 %v633
  %843 = vmatprep.subr.mxu0 %v641
  %844 = vmatpush1.msra.mxu0 %v640
  %845 = vmatprep.subr.mxu0 %v648
  %846 = vmatpush1.msra.mxu0 %v647
  %847 = vmatprep.subr.mxu0 %v655
  %848 = vmatpush1.msra.mxu0 %v654
  %849 = vmatprep.subr.mxu0 %v662
  %850 = vmatpush1.msra.mxu0 %v661
  %851 = vmatprep.subr.mxu0 %v669
  %852 = vmatpush1.msra.mxu0 %v668
  %853 = vmatprep.subr.mxu0 %v676
  %854 = vmatpush1.msra.mxu0 %v675
  %855 = vmatprep.subr.mxu0 %v683
  %856 = vmatpush1.msra.mxu0 %v682
  %857 = vmatprep.subr.mxu0 %v690
  %858 = vmatpush1.msra.mxu0 %v689
  %859 = vmatprep.subr.mxu0 %v697
  %860 = vmatpush1.msra.mxu0 %v696
  %861 = vmatprep.subr.mxu0 %v704
  %862 = vmatpush1.msra.mxu0 %v703
  %863 = vmatprep.subr.mxu0 %v711
  %864 = vmatpush1.msra.mxu0 %v710
  %865 = vmatprep.subr.mxu0 %v718
  %866 = vmatpush1.msra.mxu0 %v717
  %867 = vmatprep.subr.mxu0 %v725
  %868 = vmatpush1.msra.mxu0 %v724
  %869 = vmatprep.subr.mxu0 0.0
  %870 = vmatpush1.msra.mxu0 0.0
  %871 = vmatprep.subr.mxu0 0.0
  %872 = vmatpush1.msra.mxu0 0.0
  %873 = vmatprep.subr.mxu0 0.0
  %874 = vmatpush1.msra.mxu0 0.0
  %875 = vmatprep.subr.mxu0 0.0
  %876 = vmatpush1.msra.mxu0 0.0
  %877 = vmatprep.subr.mxu0 0.0
  %878 = vmatpush1.msra.mxu0 0.0
  %879 = vmatprep.subr.mxu0 0.0
  %880 = vmatpush1.msra.mxu0 0.0
  %881 = vmatprep.subr.mxu0 0.0
  %882 = vmatpush1.msra.mxu0 0.0
  %883 = vmatprep.subr.mxu0 0.0
  %884 = vmatpush1.msra.mxu0 0.0
  %885 = vmatprep.subr.mxu0 0.0
  %886 = vmatpush1.msra.mxu0 0.0
  %887 = vmatprep.subr.mxu0 0.0
  %888 = vmatpush1.msra.mxu0 0.0
  %889 = vmatprep.subr.mxu0 0.0
  %890 = vmatpush1.msra.mxu0 0.0
  %891 = vmatprep.subr.mxu0 0.0
  %892 = vmatpush1.msra.mxu0 0.0
  %893 = vmatprep.subr.mxu0 0.0
  %894 = vmatpush1.msra.mxu0 0.0
  %895 = vmatprep.subr.mxu0 0.0
  %896 = vmatpush1.msra.mxu0 0.0
  %897 = vmatprep.subr.mxu0 0.0
  %898 = vmatpush1.msra.mxu0 0.0
  %899 = vmatprep.subr.mxu0 0.0
  %900 = vmatpush1.msra.mxu0 0.0
  %901 = vmatprep.mubr.f32.mxu0 0.0
  %902 = vmatmul.mubr.f32.gmra.mrb[0].mxu0 %v616
  %v903 = vpop.f32.mrb[0].mxu0
  %v904 = vadd.f32 %v742, %v903
  %v905 = vpop.f32.mrb[0].mxu0
  %v906 = vadd.f32 %v746, %v905
  %907 = vdwg.mxu0
  %908 = vmatprep.subr.mxu0 %v622
  %909 = vmatpush1.msra.mxu0 %v621
  %910 = vmatprep.subr.mxu0 %v629
  %911 = vmatpush1.msra.mxu0 %v628
  %912 = vmatprep.subr.mxu0 %v636
  %913 = vmatpush1.msra.mxu0 %v635
  %914 = vmatprep.subr.mxu0 %v643
  %915 = vmatpush1.msra.mxu0 %v642
  %916 = vmatprep.subr.mxu0 %v650
  %917 = vmatpush1.msra.mxu0 %v649
  %918 = vmatprep.subr.mxu0 %v657
  %919 = vmatpush1.msra.mxu0 %v656
  %920 = vmatprep.subr.mxu0 %v664
  %921 = vmatpush1.msra.mxu0 %v663
  %922 = vmatprep.subr.mxu0 %v671
  %923 = vmatpush1.msra.mxu0 %v670
  %924 = vmatprep.subr.mxu0 %v678
  %925 = vmatpush1.msra.mxu0 %v677
  %926 = vmatprep.subr.mxu0 %v685
  %927 = vmatpush1.msra.mxu0 %v684
  %928 = vmatprep.subr.mxu0 %v692
  %929 = vmatpush1.msra.mxu0 %v691
  %930 = vmatprep.subr.mxu0 %v699
  %931 = vmatpush1.msra.mxu0 %v698
  %932 = vmatprep.subr.mxu0 %v706
  %933 = vmatpush1.msra.mxu0 %v705
  %934 = vmatprep.subr.mxu0 %v713
  %935 = vmatpush1.msra.mxu0 %v712
  %936 = vmatprep.subr.mxu0 %v720
  %937 = vmatpush1.msra.mxu0 %v719
  %938 = vmatprep.subr.mxu0 %v727
  %939 = vmatpush1.msra.mxu0 %v726
  %940 = vmatprep.subr.mxu0 0.0
  %941 = vmatpush1.msra.mxu0 0.0
  %942 = vmatprep.subr.mxu0 0.0
  %943 = vmatpush1.msra.mxu0 0.0
  %944 = vmatprep.subr.mxu0 0.0
  %945 = vmatpush1.msra.mxu0 0.0
  %946 = vmatprep.subr.mxu0 0.0
  %947 = vmatpush1.msra.mxu0 0.0
  %948 = vmatprep.subr.mxu0 0.0
  %949 = vmatpush1.msra.mxu0 0.0
  %950 = vmatprep.subr.mxu0 0.0
  %951 = vmatpush1.msra.mxu0 0.0
  %952 = vmatprep.subr.mxu0 0.0
  %953 = vmatpush1.msra.mxu0 0.0
  %954 = vmatprep.subr.mxu0 0.0
  %955 = vmatpush1.msra.mxu0 0.0
  %956 = vmatprep.subr.mxu0 0.0
  %957 = vmatpush1.msra.mxu0 0.0
  %958 = vmatprep.subr.mxu0 0.0
  %959 = vmatpush1.msra.mxu0 0.0
  %960 = vmatprep.subr.mxu0 0.0
  %961 = vmatpush1.msra.mxu0 0.0
  %962 = vmatprep.subr.mxu0 0.0
  %963 = vmatpush1.msra.mxu0 0.0
  %964 = vmatprep.subr.mxu0 0.0
  %965 = vmatpush1.msra.mxu0 0.0
  %966 = vmatprep.subr.mxu0 0.0
  %967 = vmatpush1.msra.mxu0 0.0
  %968 = vmatprep.subr.mxu0 0.0
  %969 = vmatpush1.msra.mxu0 0.0
  %970 = vmatprep.subr.mxu0 0.0
  %971 = vmatpush1.msra.mxu0 0.0
  %972 = vmatprep.mubr.f32.mxu0 0.0
  %973 = vmatmul.mubr.f32.gmra.mrb[0].mxu0 %v616
  %v974 = vpop.f32.mrb[0].mxu0
  %v975 = vadd.f32 %v750, %v974
  %v976 = vpop.f32.mrb[0].mxu0
  %v977 = vadd.f32 %v754, %v976
  %978 = vdwg.mxu0
  %979 = vmatprep.subr.mxu0 0.0
  %980 = vmatpush1.msra.mxu0 %v623
  %981 = vmatprep.subr.mxu0 0.0
  %982 = vmatpush1.msra.mxu0 %v630
  %983 = vmatprep.subr.mxu0 0.0
  %984 = vmatpush1.msra.mxu0 %v637
  %985 = vmatprep.subr.mxu0 0.0
  %986 = vmatpush1.msra.mxu0 %v644
  %987 = vmatprep.subr.mxu0 0.0
  %988 = vmatpush1.msra.mxu0 %v651
  %989 = vmatprep.subr.mxu0 0.0
  %990 = vmatpush1.msra.mxu0 %v658
  %991 = vmatprep.subr.mxu0 0.0
  %992 = vmatpush1.msra.mxu0 %v665
  %993 = vmatprep.subr.mxu0 0.0
  %994 = vmatpush1.msra.mxu0 %v672
  %995 = vmatprep.subr.mxu0 0.0
  %996 = vmatpush1.msra.mxu0 %v679
  %997 = vmatprep.subr.mxu0 0.0
  %998 = vmatpush1.msra.mxu0 %v686
  %999 = vmatprep.subr.mxu0 0.0
  %1000 = vmatpush1.msra.mxu0 %v693
  %1001 = vmatprep.subr.mxu0 0.0
  %1002 = vmatpush1.msra.mxu0 %v700
  %1003 = vmatprep.subr.mxu0 0.0
  %1004 = vmatpush1.msra.mxu0 %v707
  %1005 = vmatprep.subr.mxu0 0.0
  %1006 = vmatpush1.msra.mxu0 %v714
  %1007 = vmatprep.subr.mxu0 0.0
  %1008 = vmatpush1.msra.mxu0 %v721
  %1009 = vmatprep.subr.mxu0 0.0
  %1010 = vmatpush1.msra.mxu0 %v728
  %1011 = vmatprep.subr.mxu0 0.0
  %1012 = vmatpush1.msra.mxu0 0.0
  %1013 = vmatprep.subr.mxu0 0.0
  %1014 = vmatpush1.msra.mxu0 0.0
  %1015 = vmatprep.subr.mxu0 0.0
  %1016 = vmatpush1.msra.mxu0 0.0
  %1017 = vmatprep.subr.mxu0 0.0
  %1018 = vmatpush1.msra.mxu0 0.0
  %1019 = vmatprep.subr.mxu0 0.0
  %1020 = vmatpush1.msra.mxu0 0.0
  %1021 = vmatprep.subr.mxu0 0.0
  %1022 = vmatpush1.msra.mxu0 0.0
  %1023 = vmatprep.subr.mxu0 0.0
  %1024 = vmatpush1.msra.mxu0 0.0
  %1025 = vmatprep.subr.mxu0 0.0
  %1026 = vmatpush1.msra.mxu0 0.0
  %1027 = vmatprep.subr.mxu0 0.0
  %1028 = vmatpush1.msra.mxu0 0.0
  %1029 = vmatprep.subr.mxu0 0.0
  %1030 = vmatpush1.msra.mxu0 0.0
  %1031 = vmatprep.subr.mxu0 0.0
  %1032 = vmatpush1.msra.mxu0 0.0
  %1033 = vmatprep.subr.mxu0 0.0
  %1034 = vmatpush1.msra.mxu0 0.0
  %1035 = vmatprep.subr.mxu0 0.0
  %1036 = vmatpush1.msra.mxu0 0.0
  %1037 = vmatprep.subr.mxu0 0.0
  %1038 = vmatpush1.msra.mxu0 0.0
  %1039 = vmatprep.subr.mxu0 0.0
  %1040 = vmatpush1.msra.mxu0 0.0
  %1041 = vmatprep.subr.mxu0 0.0
  %1042 = vmatpush1.msra.mxu0 0.0
  %1043 = vmatprep.mubr.f32.mxu0 0.0
  %1044 = vmatmul.mubr.f32.gmra.mrb[0].mxu0 %v616
  %v1045 = vpop.f32.mrb[0].mxu0
  %v1046 = vadd.f32 %v758, %v1045
  %v1047 = vpop.f32.mrb[0].mxu0
  %1048 = vdwg.mxu0
  %v1049 = vsub.f32 0.0, %v833
  %v1050 = vsub.f32 0.0, %v835
  %v1051 = vsub.f32 0.0, %v904
  %v1052 = vsub.f32 0.0, %v906
  %v1053 = vsub.f32 0.0, %v975
  %v1054 = vsub.f32 0.0, %v977
  %v1055 = vsub.f32 0.0, %v1046
  %v1056 = vmul.f32 %v1049, 1.442695
  %v1057 = vpow.pop %v1056
  %v1058 = vmul.f32 %v1050, 1.442695
  %v1059 = vpow.pop %v1058
  %v1060 = vmul.f32 %v1051, 1.442695
  %v1061 = vpow.pop %v1060
  %v1062 = vmul.f32 %v1052, 1.442695
  %v1063 = vpow.pop %v1062
  %v1064 = vmul.f32 %v1053, 1.442695
  %v1065 = vpow.pop %v1064
  %v1066 = vmul.f32 %v1054, 1.442695
  %v1067 = vpow.pop %v1066
  %v1068 = vmul.f32 %v1055, 1.442695
  %v1069 = vpow.pop %v1068
  %v1070 = vadd.f32 %v1057, 1.0
  %v1071 = vadd.f32 %v1059, 1.0
  %v1072 = vadd.f32 %v1061, 1.0
  %v1073 = vadd.f32 %v1063, 1.0
  %v1074 = vadd.f32 %v1065, 1.0
  %v1075 = vadd.f32 %v1067, 1.0
  %v1076 = vadd.f32 %v1069, 1.0
  %v1077 = vrcp.pop %v1070
  %v1078 = vrcp.pop %v1071
  %v1079 = vrcp.pop %v1072
  %v1080 = vrcp.pop %v1073
  %v1081 = vrcp.pop %v1074
  %v1082 = vrcp.pop %v1075
  %v1083 = vrcp.pop %v1076
  %1084 = vst [vmem:[%s9] sm:$0xff] %v1077
  %1085 = vst [vmem:[%s9 + $0x8] sm:$0xff] %v1078
  %1086 = vst [vmem:[%s9 + $0x10] sm:$0xff] %v1079
  %1087 = vst [vmem:[%s9 + $0x18] sm:$0xff] %v1080
  %1088 = vst [vmem:[%s9 + $0x20] sm:$0xff] %v1081
  %1089 = vst [vmem:[%s9 + $0x28] sm:$0xff] %v1082
  %1090 = vst.msk [vmem:[%s9 + $0x30] sm:$0xff] %vm144, %v1083
  // Predicated region
  $region38: #{autoencoder_forward.1} parent=0 // pred_check
    _
  $region39: #{autoencoder_forward.1} parent=0 // pred_check_branch
    %1092 = sbr.rel (0) target = $region41
  $region40: #{autoencoder_forward.1} parent=0 // pred_region
    _
  $region41: #{autoencoder_forward.1} parent=0 // pred_fallthru
    _
  // Predicated region
  $region42: #{autoencoder_forward.1} parent=0 // pred_check
    _
  $region43: #{autoencoder_forward.1} parent=0 // pred_check_branch
    %1094 = sbr.rel (0) target = $region45
  $region44: #{autoencoder_forward.1} parent=0 // pred_region
    _
  $region45: #{autoencoder_forward.1} parent=0 // pred_fallthru
    _

</llo_original>
